<compile_context>
chip_gen: v5e
topology: v5e:2x2
jax: 0.10.0
libtpu: 0.0.40
codegen_flags: <defaults>
</compile_context>

<pallas_src>
import jax
import jax.numpy as jnp
from jax.experimental import pallas as pl
from jax.experimental.pallas import tpu as pltpu


# ----------------------------------------------------------------------------
# Kernels
# ----------------------------------------------------------------------------
def _pa_kernel_small_c(w_ref, b_ref, x_ref, o_ref):
    """Small-channel path: unrolled VPU multiply-adds.

    w_ref : SMEM (C, C) f32   (PyTorch conv weight, rows = output channels)
    b_ref : SMEM (C,)   f32
    x_ref : VMEM (C, T) input dtype, T lane-dense (multiple of 128 or full HW)
    o_ref : VMEM (C, T) input dtype
    """
    x = x_ref[...]
    C = x.shape[0]
    # Per-input-channel lane-dense rows, upcast once to f32 for compute
    # (required on v5e; cheap everywhere).
    xs = [x[ci:ci + 1, :].astype(jnp.float32) for ci in range(C)]
    rows = []
    for co in range(C):
        acc = xs[0] * w_ref[co, 0]
        for ci in range(1, C):
            acc = acc + xs[ci] * w_ref[co, ci]
        y = jax.nn.sigmoid(acc + b_ref[co])          # EUP
        rows.append(xs[co] * y)                      # VPU
    o_ref[...] = jnp.concatenate(rows, axis=0).astype(o_ref.dtype)


def _pa_kernel_mxu(w_ref, b_ref, x_ref, o_ref):
    """Large-channel fallback: Y = W @ X on the MXU.

    w_ref : VMEM (C, C) f32
    b_ref : VMEM (C, 1) f32
    x_ref : VMEM (C, T)
    """
    xf = x_ref[...].astype(jnp.float32)
    y = jnp.dot(w_ref[...], xf, preferred_element_type=jnp.float32) + b_ref[...]
    o_ref[...] = (xf * jax.nn.sigmoid(y)).astype(o_ref.dtype)


# ----------------------------------------------------------------------------
# Wrapper
# ----------------------------------------------------------------------------
def _pick_tile_hw(hw, c, itemsize, target_bytes=2 << 20):
    """Largest lane-dense HW tile: multiple of 128 dividing hw, capped so a
    single (C, tile) block stays around `target_bytes` (keeps double-buffered
    in+out well inside v7x's 64 MiB VMEM while amortizing per-step overhead)."""
    if hw % 128 != 0:
        return hw  # full-extent block: always legal, no padding needed
    max_elems = max(128, target_bytes // max(1, c * itemsize))
    best, cand = 128, 128
    while cand <= hw and cand <= max_elems:
        if hw % cand == 0:
            best = cand
        cand += 128
    return best


def pa_forward(x_nchw, weight, bias):
    """x_nchw: (N, C, H, W); weight: (C, C) or (C, C, 1, 1); bias: (C,)."""
    N, C, H, W = x_nchw.shape
    HW = H * W

    # Free reshape (no HBM transpose): NCHW -> (N, C, HW)
    x3 = x_nchw.reshape(N, C, HW)
    tile_hw = _pick_tile_hw(HW, C, x_nchw.dtype.itemsize)
    grid = (N, HW // tile_hw)

    w2 = jnp.asarray(weight).reshape(C, C).astype(jnp.float32)
    b1 = jnp.asarray(bias).reshape(C).astype(jnp.float32)

    x_spec = pl.BlockSpec((None, C, tile_hw), lambda n, j: (n, 0, j))
    o_spec = pl.BlockSpec((None, C, tile_hw), lambda n, j: (n, 0, j))

    if C <= 8:
        # Tiny weights/bias: keep as scalars in SMEM, unroll on the VPU.
        kernel = _pa_kernel_small_c
        in_specs = [
            pl.BlockSpec(memory_space=pltpu.MemorySpace.SMEM),  # W (C, C)
            pl.BlockSpec(memory_space=pltpu.MemorySpace.SMEM),  # b (C,)
            x_spec,
        ]
        args = (w2, b1, x3)
    else:
        # Production-size channels: use the MXU with VMEM-resident weights.
        kernel = _pa_kernel_mxu
        in_specs = [
            pl.BlockSpec((C, C), lambda n, j: (0, 0)),
            pl.BlockSpec((C, 1), lambda n, j: (0, 0)),
            x_spec,
        ]
        args = (w2, b1.reshape(C, 1), x3)

    out3 = pl.pallas_call(
        kernel,
        out_shape=jax.ShapeDtypeStruct((N, C, HW), x_nchw.dtype),
        grid=grid,
        in_specs=in_specs,
        out_specs=o_spec,
        compiler_params=pltpu.CompilerParams(
            dimension_semantics=("parallel", "parallel"),
            vmem_limit_bytes=32 * 1024 * 1024,
        ),
    )(*args)

    return out3.reshape(N, C, H, W)


def pa_reference(x_nchw, weight, bias):
    """Plain-JAX reference of the PyTorch forward for validation."""
    N, C, H, W = x_nchw.shape
    x3 = x_nchw.reshape(N, C, H * W)
    w2 = jnp.asarray(weight).reshape(C, C)
    y = jnp.einsum("oc,ncp->nop", w2, x3) + jnp.asarray(bias).reshape(1, C, 1)
    out = x3 * jax.nn.sigmoid(y)
    return out.reshape(N, C, H, W)


if __name__ == "__main__":
    key = jax.random.PRNGKey(0)
    kx, kw, kb = jax.random.split(key, 3)

    N, C, H, W = 2, 4, 16, 16
    x = jax.random.normal(kx, (N, C, H, W), dtype=jnp.float32)

    # Deterministic synthetic parameters for Conv2d(C, C, 1):
    # weight (C_out, C_in) (1x1 kernel squeezed); bias (C_out,)
    fan_in = C
    bound = 1.0 / (fan_in ** 0.5)
    weight = jax.random.uniform(kw, (C, C), minval=-bound, maxval=bound,
                                dtype=jnp.float32)
    bias = jax.random.uniform(kb, (C,), minval=-bound, maxval=bound,
                              dtype=jnp.float32)

    out = pa_forward(x, weight, bias)
    out = jax.block_until_ready(out)

    ref = pa_reference(x, weight, bias)
    assert out.shape == (N, C, H, W)
    assert jnp.allclose(out, ref, atol=1e-5, rtol=1e-5), "mismatch vs reference"

    print("KERNEL_OK")
</pallas_src>

<mosaic_0001>
module attributes {stable_mosaic.version = 11 : i64} {
  func.func @_pa_kernel_small_c(%arg0: i32, %arg1: i32, %arg2: memref<4x4xf32, #tpu.memory_space<smem>>, %arg3: memref<4xf32, #tpu.memory_space<smem>>, %arg4: memref<1x4x256xf32, #tpu.memory_space<vmem>>, %arg5: memref<1x4x256xf32, #tpu.memory_space<vmem>>) attributes {dimension_semantics = [#tpu.dimension_semantics<parallel>, #tpu.dimension_semantics<parallel>], iteration_bounds = array<i64: 2, 1>, scalar_prefetch = 0 : i64, scratch_operands = 0 : i64, tpu.core_type = #tpu.core_type<tc>, window_params = [{transform_indices = @transform_0, window_bounds = array<i64: 4, 4>}, {transform_indices = @transform_1, window_bounds = array<i64: 4>}, {transform_indices = @transform_2, window_bounds = array<i64: 1, 4, 256>}, {transform_indices = @transform_3, window_bounds = array<i64: 1, 4, 256>}]} {
    %c0 = arith.constant 0 : index
    %c0_0 = arith.constant 0 : index
    %c0_1 = arith.constant 0 : index
    %0 = vector.load %arg4[%c0, %c0_0, %c0_1] : memref<1x4x256xf32, #tpu.memory_space<vmem>>, vector<1x4x256xf32>
    %1 = vector.shape_cast %0 : vector<1x4x256xf32> to vector<4x256xf32>
    %2 = vector.extract_strided_slice %1 {offsets = [0, 0], sizes = [1, 256], strides = [1, 1]} : vector<4x256xf32> to vector<1x256xf32>
    %3 = vector.extract_strided_slice %1 {offsets = [1, 0], sizes = [1, 256], strides = [1, 1]} : vector<4x256xf32> to vector<1x256xf32>
    %4 = vector.extract_strided_slice %1 {offsets = [2, 0], sizes = [1, 256], strides = [1, 1]} : vector<4x256xf32> to vector<1x256xf32>
    %5 = vector.extract_strided_slice %1 {offsets = [3, 0], sizes = [1, 256], strides = [1, 1]} : vector<4x256xf32> to vector<1x256xf32>
    %c0_2 = arith.constant 0 : index
    %c0_3 = arith.constant 0 : index
    %6 = memref.load %arg2[%c0_2, %c0_3] : memref<4x4xf32, #tpu.memory_space<smem>>
    %7 = vector.broadcast %6 : f32 to vector<1x256xf32>
    %8 = arith.mulf %2, %7 : vector<1x256xf32>
    %c0_4 = arith.constant 0 : index
    %c1 = arith.constant 1 : index
    %9 = memref.load %arg2[%c0_4, %c1] : memref<4x4xf32, #tpu.memory_space<smem>>
    %10 = vector.broadcast %9 : f32 to vector<1x256xf32>
    %11 = arith.mulf %3, %10 : vector<1x256xf32>
    %12 = arith.addf %8, %11 : vector<1x256xf32>
    %c0_5 = arith.constant 0 : index
    %c2 = arith.constant 2 : index
    %13 = memref.load %arg2[%c0_5, %c2] : memref<4x4xf32, #tpu.memory_space<smem>>
    %14 = vector.broadcast %13 : f32 to vector<1x256xf32>
    %15 = arith.mulf %4, %14 : vector<1x256xf32>
    %16 = arith.addf %12, %15 : vector<1x256xf32>
    %c0_6 = arith.constant 0 : index
    %c3 = arith.constant 3 : index
    %17 = memref.load %arg2[%c0_6, %c3] : memref<4x4xf32, #tpu.memory_space<smem>>
    %18 = vector.broadcast %17 : f32 to vector<1x256xf32>
    %19 = arith.mulf %5, %18 : vector<1x256xf32>
    %20 = arith.addf %16, %19 : vector<1x256xf32>
    %c0_7 = arith.constant 0 : index
    %21 = memref.load %arg3[%c0_7] : memref<4xf32, #tpu.memory_space<smem>>
    %22 = vector.broadcast %21 : f32 to vector<1x256xf32>
    %23 = arith.addf %20, %22 : vector<1x256xf32>
    %24 = arith.negf %23 : vector<1x256xf32>
    %25 = math.exp %24 : vector<1x256xf32>
    %cst = arith.constant 1.000000e+00 : f32
    %26 = vector.broadcast %cst : f32 to vector<1x256xf32>
    %27 = arith.addf %26, %25 : vector<1x256xf32>
    %28 = arith.divf %26, %27 : vector<1x256xf32>
    %29 = arith.mulf %2, %28 : vector<1x256xf32>
    %c1_8 = arith.constant 1 : index
    %c0_9 = arith.constant 0 : index
    %30 = memref.load %arg2[%c1_8, %c0_9] : memref<4x4xf32, #tpu.memory_space<smem>>
    %31 = vector.broadcast %30 : f32 to vector<1x256xf32>
    %32 = arith.mulf %2, %31 : vector<1x256xf32>
    %c1_10 = arith.constant 1 : index
    %c1_11 = arith.constant 1 : index
    %33 = memref.load %arg2[%c1_10, %c1_11] : memref<4x4xf32, #tpu.memory_space<smem>>
    %34 = vector.broadcast %33 : f32 to vector<1x256xf32>
    %35 = arith.mulf %3, %34 : vector<1x256xf32>
    %36 = arith.addf %32, %35 : vector<1x256xf32>
    %c1_12 = arith.constant 1 : index
    %c2_13 = arith.constant 2 : index
    %37 = memref.load %arg2[%c1_12, %c2_13] : memref<4x4xf32, #tpu.memory_space<smem>>
    %38 = vector.broadcast %37 : f32 to vector<1x256xf32>
    %39 = arith.mulf %4, %38 : vector<1x256xf32>
    %40 = arith.addf %36, %39 : vector<1x256xf32>
    %c1_14 = arith.constant 1 : index
    %c3_15 = arith.constant 3 : index
    %41 = memref.load %arg2[%c1_14, %c3_15] : memref<4x4xf32, #tpu.memory_space<smem>>
    %42 = vector.broadcast %41 : f32 to vector<1x256xf32>
    %43 = arith.mulf %5, %42 : vector<1x256xf32>
    %44 = arith.addf %40, %43 : vector<1x256xf32>
    %c1_16 = arith.constant 1 : index
    %45 = memref.load %arg3[%c1_16] : memref<4xf32, #tpu.memory_space<smem>>
    %46 = vector.broadcast %45 : f32 to vector<1x256xf32>
    %47 = arith.addf %44, %46 : vector<1x256xf32>
    %48 = arith.negf %47 : vector<1x256xf32>
    %49 = math.exp %48 : vector<1x256xf32>
    %cst_17 = arith.constant 1.000000e+00 : f32
    %50 = vector.broadcast %cst_17 : f32 to vector<1x256xf32>
    %51 = arith.addf %50, %49 : vector<1x256xf32>
    %52 = arith.divf %50, %51 : vector<1x256xf32>
    %53 = arith.mulf %3, %52 : vector<1x256xf32>
    %c2_18 = arith.constant 2 : index
    %c0_19 = arith.constant 0 : index
    %54 = memref.load %arg2[%c2_18, %c0_19] : memref<4x4xf32, #tpu.memory_space<smem>>
    %55 = vector.broadcast %54 : f32 to vector<1x256xf32>
    %56 = arith.mulf %2, %55 : vector<1x256xf32>
    %c2_20 = arith.constant 2 : index
    %c1_21 = arith.constant 1 : index
    %57 = memref.load %arg2[%c2_20, %c1_21] : memref<4x4xf32, #tpu.memory_space<smem>>
    %58 = vector.broadcast %57 : f32 to vector<1x256xf32>
    %59 = arith.mulf %3, %58 : vector<1x256xf32>
    %60 = arith.addf %56, %59 : vector<1x256xf32>
    %c2_22 = arith.constant 2 : index
    %c2_23 = arith.constant 2 : index
    %61 = memref.load %arg2[%c2_22, %c2_23] : memref<4x4xf32, #tpu.memory_space<smem>>
    %62 = vector.broadcast %61 : f32 to vector<1x256xf32>
    %63 = arith.mulf %4, %62 : vector<1x256xf32>
    %64 = arith.addf %60, %63 : vector<1x256xf32>
    %c2_24 = arith.constant 2 : index
    %c3_25 = arith.constant 3 : index
    %65 = memref.load %arg2[%c2_24, %c3_25] : memref<4x4xf32, #tpu.memory_space<smem>>
    %66 = vector.broadcast %65 : f32 to vector<1x256xf32>
    %67 = arith.mulf %5, %66 : vector<1x256xf32>
    %68 = arith.addf %64, %67 : vector<1x256xf32>
    %c2_26 = arith.constant 2 : index
    %69 = memref.load %arg3[%c2_26] : memref<4xf32, #tpu.memory_space<smem>>
    %70 = vector.broadcast %69 : f32 to vector<1x256xf32>
    %71 = arith.addf %68, %70 : vector<1x256xf32>
    %72 = arith.negf %71 : vector<1x256xf32>
    %73 = math.exp %72 : vector<1x256xf32>
    %cst_27 = arith.constant 1.000000e+00 : f32
    %74 = vector.broadcast %cst_27 : f32 to vector<1x256xf32>
    %75 = arith.addf %74, %73 : vector<1x256xf32>
    %76 = arith.divf %74, %75 : vector<1x256xf32>
    %77 = arith.mulf %4, %76 : vector<1x256xf32>
    %c3_28 = arith.constant 3 : index
    %c0_29 = arith.constant 0 : index
    %78 = memref.load %arg2[%c3_28, %c0_29] : memref<4x4xf32, #tpu.memory_space<smem>>
    %79 = vector.broadcast %78 : f32 to vector<1x256xf32>
    %80 = arith.mulf %2, %79 : vector<1x256xf32>
    %c3_30 = arith.constant 3 : index
    %c1_31 = arith.constant 1 : index
    %81 = memref.load %arg2[%c3_30, %c1_31] : memref<4x4xf32, #tpu.memory_space<smem>>
    %82 = vector.broadcast %81 : f32 to vector<1x256xf32>
    %83 = arith.mulf %3, %82 : vector<1x256xf32>
    %84 = arith.addf %80, %83 : vector<1x256xf32>
    %c3_32 = arith.constant 3 : index
    %c2_33 = arith.constant 2 : index
    %85 = memref.load %arg2[%c3_32, %c2_33] : memref<4x4xf32, #tpu.memory_space<smem>>
    %86 = vector.broadcast %85 : f32 to vector<1x256xf32>
    %87 = arith.mulf %4, %86 : vector<1x256xf32>
    %88 = arith.addf %84, %87 : vector<1x256xf32>
    %c3_34 = arith.constant 3 : index
    %c3_35 = arith.constant 3 : index
    %89 = memref.load %arg2[%c3_34, %c3_35] : memref<4x4xf32, #tpu.memory_space<smem>>
    %90 = vector.broadcast %89 : f32 to vector<1x256xf32>
    %91 = arith.mulf %5, %90 : vector<1x256xf32>
    %92 = arith.addf %88, %91 : vector<1x256xf32>
    %c3_36 = arith.constant 3 : index
    %93 = memref.load %arg3[%c3_36] : memref<4xf32, #tpu.memory_space<smem>>
    %94 = vector.broadcast %93 : f32 to vector<1x256xf32>
    %95 = arith.addf %92, %94 : vector<1x256xf32>
    %96 = arith.negf %95 : vector<1x256xf32>
    %97 = math.exp %96 : vector<1x256xf32>
    %cst_37 = arith.constant 1.000000e+00 : f32
    %98 = vector.broadcast %cst_37 : f32 to vector<1x256xf32>
    %99 = arith.addf %98, %97 : vector<1x256xf32>
    %100 = arith.divf %98, %99 : vector<1x256xf32>
    %101 = arith.mulf %5, %100 : vector<1x256xf32>
    %102 = tpu.concatenate %29, %53, %77, %101 in 0 : vector<1x256xf32>, vector<1x256xf32>, vector<1x256xf32>, vector<1x256xf32> -> vector<4x256xf32>
    %c0_38 = arith.constant 0 : index
    %c0_39 = arith.constant 0 : index
    %c0_40 = arith.constant 0 : index
    %103 = vector.load %arg5[%c0_38, %c0_39, %c0_40] : memref<1x4x256xf32, #tpu.memory_space<vmem>>, vector<1x4x256xf32>
    %104 = vector.shape_cast %103 : vector<1x4x256xf32> to vector<4x256xf32>
    %105 = vector.shape_cast %102 : vector<4x256xf32> to vector<1x4x256xf32>
    tpu.vector_store %arg5[%c0_38, %c0_39, %c0_40], %105 {strides = array<i32>} : memref<1x4x256xf32, #tpu.memory_space<vmem>>, vector<1x4x256xf32>,
    return
  }
  func.func @transform_0(%arg0: i32, %arg1: i32) -> (i32, i32) {
    %c0_i32 = arith.constant 0 : i32
    %c0_i32_0 = arith.constant 0 : i32
    %c0_i32_1 = arith.constant 0 : i32
    return %c0_i32, %c0_i32_0 : i32, i32
  }
  func.func @transform_1(%arg0: i32, %arg1: i32) -> i32 {
    %c0_i32 = arith.constant 0 : i32
    %c0_i32_0 = arith.constant 0 : i32
    return %c0_i32 : i32
  }
  func.func @transform_2(%arg0: i32, %arg1: i32) -> (i32, i32, i32) {
    %c0_i32 = arith.constant 0 : i32
    %c0_i32_0 = arith.constant 0 : i32
    return %arg0, %c0_i32, %arg1 : i32, i32, i32
  }
  func.func @transform_3(%arg0: i32, %arg1: i32) -> (i32, i32, i32) {
    %c0_i32 = arith.constant 0 : i32
    %c0_i32_0 = arith.constant 0 : i32
    return %arg0, %c0_i32, %arg1 : i32, i32, i32
  }
}

</mosaic_0001>

<llo_original>
// kernel: tpu_custom_call.1
$region0: #{tpu_custom_call.1}
  #allocation0 [shape = 'u32[]', space=smem, size = 0x4, offset = 0x4, fixed_abs, tag = 'smem constant byte address 0x4 - core index']
  #allocation1 [shape = 'u32[72,128]{1,0:T(1,128)}', space=vmem, size = 0x9000, scoped, tag = 'internal scratch']
  %s0 = inlined_call_operand.hbm [shape: f32[4,4], index: 0, kind: input, shape index: {}]
  %s1 = inlined_call_operand.hbm [shape: f32[4], index: 1, kind: input, shape index: {}]
  %s2 = inlined_call_operand.hbm [shape: f32[2,4,256], index: 2, kind: input, shape index: {}]
  %s3 = inlined_call_operand.hbm [shape: f32[2,4,256], index: 3, kind: output, shape index: {}]
  %s4 = sld [smem:[#allocation0]]
  $region57: #{tpu_custom_call.1} parent=0
    _
  %s6 = ssub.s32 1, %s4
  %s7 = scalar_select 0, %s6, %s4
  $region1: #{tpu_custom_call.1} parent=0
    #allocation2 [shape = 'u8[2048]{0}', space=smem, size = 0x800, scoped, tag = 'input window, operand 0, single buffered']
    #allocation3 [shape = 's32[2]{0}', space=sflag, size = 0x8, scoped, tag = 'scoped memory for tpu_custom_call.1']
    #allocation4 [shape = 's32[2]{0}', space=sflag, size = 0x8, scoped, tag = 'scoped memory for tpu_custom_call.1']
    #allocation5 [shape = 's32[2]{0}', space=sflag, size = 0x8, scoped, tag = 'scoped memory for tpu_custom_call.1']
    #allocation6 [shape = 'u8[512]{0}', space=smem, size = 0x200, scoped, tag = 'input window, operand 1, single buffered']
    #allocation7 [shape = 's32[1]{0}', space=sflag, size = 0x4, scoped, tag = 'scoped memory for tpu_custom_call.1']
    #allocation8 [shape = 'u8[8192]{0}', space=vmem, size = 0x2000, scoped, tag = 'input window, operand 2']
    #allocation9 [shape = 'u8[8192]{0}', space=vmem, size = 0x2000, scoped, tag = 'output window, operand 0']
    %8 = vsyncpa [#allocation5], 0
    %9 = vsyncpa [#allocation7], 0
    %10 = vsyncpa [#allocation3], 0
    %s11 = scalar_lea.sflag [#allocation3], 1
    %12 = vsyncpa %s11, 0
    %13 = vsyncpa [#allocation4], 0
    %s14 = scalar_lea.sflag [#allocation4], 1
    %15 = vsyncpa %s14, 0
    loop: start=0, step=1, limit=4
    $region2: #{tpu_custom_call.1} parent=1 // loop_pre_header
      _
    $region3: #{tpu_custom_call.1} parent=1 // loop_header
      %s17 = sphi 0, %s21
      %p18 = scmp.ge.s32.totalorder %s17, 4
      %s24 = sphi 0, %s36
      %s25 = sphi 0, %s32
      %s26 = sphi 0, %s24
      %s27 = sphi 0, %s25
      %s28 = sphi 0, %s26
      %s29 = sphi 0, %s27
      %s37 = sphi 0, %s37
      %s39 = sphi 0, %s37
      %s40 = sphi 0, %s39
      %s54 = sphi 0, %s40
      %s58 = sphi 0, %s58
      %s60 = sphi 0, %s58
      %s61 = sphi 0, %s60
      %s75 = sphi 0, %s61
      %s83 = sphi 0, %s85
      %s86 = sphi 0, %s83
      %s87 = sphi 0, %s86
      %s103 = sphi 0, %s87
      %s111 = sphi 0, %s113
      %s114 = sphi 0, %s111
      %s115 = sphi 0, %s114
      %s131 = sphi 0, %s115
    $region4: #{tpu_custom_call.1} parent=1 // loop_header_branch
      %20 = sbr.rel (%p18) target = $region8
    $region5: #{tpu_custom_call.1} parent=1 // loop_body
      %s22 = ssub.s32 %s17, 1
      %s23 = ssub.s32 %s17, 2
      %s30 = sadd.s32 1, %s25
      %p31 = scmp.ge.s32.totalorder %s30, 1
      %s32 = scalar_select %p31, 0, %s30
      %s33 = sadd.s32 1, %s24
      %s34 = scalar_select %p31, %s33, %s24
      %p35 = scmp.ge.s32.totalorder %s34, 2
      %s36 = scalar_select %p35, 0, %s34
      %s38 = sadd.s32 %s37, 1
      %p41 = scmp.eq.s32.totalorder %s17, 1
      %p42 = scmp.ne.s32.totalorder %s37, %s39
      %p43 = scmp.eq.s32.totalorder %s17, 0
      %p44 = por %p42, %p43
      %p45 = scmp.ne.s32.totalorder %s37, %s39
      %p46 = scmp.eq.s32.totalorder %s22, 1
      %p47 = por %p45, %p46
      %p48 = scmp.ne.s32.totalorder %s39, %s40
      %p49 = scmp.eq.s32.totalorder %s22, 0
      %p50 = por %p48, %p49
      %p51 = scmp.ne.s32.totalorder %s39, %s40
      %p52 = scmp.eq.s32.totalorder %s23, 1
      %p53 = por %p51, %p52
      %p55 = scmp.ne.s32.totalorder %s40, %s54
      %p56 = scmp.eq.s32.totalorder %s23, 0
      %p57 = por %p55, %p56
      %s59 = sadd.s32 %s58, 1
      %p62 = scmp.eq.s32.totalorder %s17, 1
      %p63 = scmp.ne.s32.totalorder %s58, %s60
      %p64 = scmp.eq.s32.totalorder %s17, 0
      %p65 = por %p63, %p64
      %p66 = scmp.ne.s32.totalorder %s58, %s60
      %p67 = scmp.eq.s32.totalorder %s22, 1
      %p68 = por %p66, %p67
      %p69 = scmp.ne.s32.totalorder %s60, %s61
      %p70 = scmp.eq.s32.totalorder %s22, 0
      %p71 = por %p69, %p70
      %p72 = scmp.ne.s32.totalorder %s60, %s61
      %p73 = scmp.eq.s32.totalorder %s23, 1
      %p74 = por %p72, %p73
      %p76 = scmp.ne.s32.totalorder %s61, %s75
      %p77 = scmp.eq.s32.totalorder %s23, 0
      %p78 = por %p76, %p77
      %s79 = ssub.s32 %s24, %s36
      %s80 = ssub.s32 %s25, %s32
      %s81 = sor.u32 %s79, %s80
      %p82 = scmp.eq.s32.totalorder %s81, 0
      %s84 = sadd.s32 %s83, 1
      %s85 = scalar_select %p82, %s83, %s84
      %p88 = pneg %p82
      %p89 = scmp.eq.s32.totalorder %s17, 1
      %p90 = por %p88, %p89
      %p91 = scmp.ne.s32.totalorder %s83, %s86
      %p92 = scmp.eq.s32.totalorder %s17, 0
      %p93 = por %p91, %p92
      %p94 = scmp.ne.s32.totalorder %s83, %s86
      %p95 = scmp.eq.s32.totalorder %s22, 1
      %p96 = por %p94, %p95
      %p97 = scmp.ne.s32.totalorder %s86, %s87
      %p98 = scmp.eq.s32.totalorder %s22, 0
      %p99 = por %p97, %p98
      %p100 = scmp.ne.s32.totalorder %s86, %s87
      %p101 = scmp.eq.s32.totalorder %s23, 1
      %p102 = por %p100, %p101
      %p104 = scmp.ne.s32.totalorder %s87, %s103
      %p105 = scmp.eq.s32.totalorder %s23, 0
      %p106 = por %p104, %p105
      %s107 = ssub.s32 %s24, %s36
      %s108 = ssub.s32 %s25, %s32
      %s109 = sor.u32 %s107, %s108
      %p110 = scmp.eq.s32.totalorder %s109, 0
      %s112 = sadd.s32 %s111, 1
      %s113 = scalar_select %p110, %s111, %s112
      %p116 = pneg %p110
      %p117 = scmp.eq.s32.totalorder %s17, 1
      %p118 = por %p116, %p117
      %p119 = scmp.ne.s32.totalorder %s111, %s114
      %p120 = scmp.eq.s32.totalorder %s17, 0
      %p121 = por %p119, %p120
      %p122 = scmp.ne.s32.totalorder %s111, %s114
      %p123 = scmp.eq.s32.totalorder %s22, 1
      %p124 = por %p122, %p123
      %p125 = scmp.ne.s32.totalorder %s114, %s115
      %p126 = scmp.eq.s32.totalorder %s22, 0
      %p127 = por %p125, %p126
      %p128 = scmp.ne.s32.totalorder %s114, %s115
      %p129 = scmp.eq.s32.totalorder %s23, 1
      %p130 = por %p128, %p129
      %p132 = scmp.ne.s32.totalorder %s115, %s131
      %p133 = scmp.eq.s32.totalorder %s23, 0
      %p134 = por %p132, %p133
      %p135 = scmp.le.s32.totalorder 1, %s17
      %p136 = scmp.lt.s32.totalorder %s17, 3
      %p137 = pnand %p135, %p136
      %p138 = pneg %p137
      // Predicated region
      $region9: #{tpu_custom_call.1} parent=5 // pred_check
        _
      $region10: #{tpu_custom_call.1} parent=5 // pred_check_branch
        %140 = sbr.rel (%p137) target = $region12
      $region11: #{tpu_custom_call.1} parent=5 // pred_region
        %s141 = ssub.s32 %s17, 1
        // Predicated region
        $region13: #{tpu_custom_call.1} parent=11 // pred_check
          %p142 = pneg %p50
        $region14: #{tpu_custom_call.1} parent=11 // pred_check_branch
          %144 = sbr.rel (%p142) target = $region16
        $region15: #{tpu_custom_call.1} parent=11 // pred_region
          %146 = vsyncadd [#allocation5], 0
          %s148 = sshll.u32 %s0, 4
          %s149 = int_to_ptr.hbm [resolvable:$true] %s148
          %151 = dma.hbm_to_smem %s149, 64, [#allocation2], [#allocation5]
        $region16: #{tpu_custom_call.1} parent=11 // pred_fallthru
          _
        // Predicated region
        $region17: #{tpu_custom_call.1} parent=11 // pred_check
          %p152 = pneg %p71
        $region18: #{tpu_custom_call.1} parent=11 // pred_check_branch
          %154 = sbr.rel (%p152) target = $region20
        $region19: #{tpu_custom_call.1} parent=11 // pred_region
          %156 = vsyncadd [#allocation7], 0
          %s158 = sshll.u32 %s1, 4
          %s159 = int_to_ptr.hbm [resolvable:$true] %s158
          %161 = dma.hbm_to_smem %s159, 16, [#allocation6], [#allocation7]
        $region20: #{tpu_custom_call.1} parent=11 // pred_fallthru
          _
      $region12: #{tpu_custom_call.1} parent=5 // pred_fallthru
        _
      %p162 = scmp.lt.s32.totalorder %s17, 2
      // Predicated region
      $region21: #{tpu_custom_call.1} parent=5 // pred_check
        %p163 = pneg %p162
      $region22: #{tpu_custom_call.1} parent=5 // pred_check_branch
        %165 = sbr.rel (%p163) target = $region24
      $region23: #{tpu_custom_call.1} parent=5 // pred_region
        // Predicated region
        $region25: #{tpu_custom_call.1} parent=23 // pred_check
          %p166 = pneg %p93
        $region26: #{tpu_custom_call.1} parent=23 // pred_check_branch
          %168 = sbr.rel (%p166) target = $region28
        $region27: #{tpu_custom_call.1} parent=23 // pred_region
          %s169 = sand.u32 %s83, 1
          %s170 = scalar_lea.sflag [#allocation3], %s169
          %s171 = sand.u32 %s83, 1
          %s172 = smul.addr %s171, 8
          %s173 = scalar_lea.vmem [#allocation8], %s172
          %s174 = smul.u32 2, %s25
          %176 = vsyncadd %s170, 0
          %s177 = smul.addr %s24, 2
          %s178 = sadd.s32 %s174, %s177
          %s179 = smul.addr %s178, 4
          %s180 = scalar_lea.hbm %s2, %s179
          %s182 = sshll.u32 %s180, 4
          %s183 = int_to_ptr.hbm [resolvable:$true] %s182
          %s184 = sshll.u32 %s173, 4
          %s185 = int_to_ptr.vmem [resolvable:$true] %s184
          %187 = dma.hbm_to_vmem [thread:$0]  %s183, 128, %s185, %s170
        $region28: #{tpu_custom_call.1} parent=23 // pred_fallthru
          _
      $region24: #{tpu_custom_call.1} parent=5 // pred_fallthru
        _
      %p188 = scmp.le.s32.totalorder 1, %s17
      %p189 = scmp.lt.s32.totalorder %s17, 3
      %p190 = pnand %p188, %p189
      %p191 = pneg %p190
      // Predicated region
      $region29: #{tpu_custom_call.1} parent=5 // pred_check
        _
      $region30: #{tpu_custom_call.1} parent=5 // pred_check_branch
        %193 = sbr.rel (%p190) target = $region32
      $region31: #{tpu_custom_call.1} parent=5 // pred_region
        %s194 = ssub.s32 %s17, 1
        // Predicated region
        $region33: #{tpu_custom_call.1} parent=31 // pred_check
          %p195 = pneg %p50
        $region34: #{tpu_custom_call.1} parent=31 // pred_check_branch
          %197 = sbr.rel (%p195) target = $region36
        $region35: #{tpu_custom_call.1} parent=31 // pred_region
          %199 = dma.done [#allocation5], 64
        $region36: #{tpu_custom_call.1} parent=31 // pred_fallthru
          _
        // Predicated region
        $region37: #{tpu_custom_call.1} parent=31 // pred_check
          %p200 = pneg %p71
        $region38: #{tpu_custom_call.1} parent=31 // pred_check_branch
          %202 = sbr.rel (%p200) target = $region40
        $region39: #{tpu_custom_call.1} parent=31 // pred_region
          %204 = dma.done [#allocation7], 16
        $region40: #{tpu_custom_call.1} parent=31 // pred_fallthru
          _
        %s205 = sand.u32 %s86, 1
        %s206 = scalar_lea.sflag [#allocation3], %s205
        %s207 = sand.u32 %s86, 1
        %s208 = smul.addr %s207, 8
        %s209 = scalar_lea.vmem [#allocation8], %s208
        // Predicated region
        $region41: #{tpu_custom_call.1} parent=31 // pred_check
          %p210 = pneg %p99
        $region42: #{tpu_custom_call.1} parent=31 // pred_check_branch
          %212 = sbr.rel (%p210) target = $region44
        $region43: #{tpu_custom_call.1} parent=31 // pred_region
          %214 = dma.done %s206, 128
        $region44: #{tpu_custom_call.1} parent=31 // pred_fallthru
          _
        %215 = sfence
        %p216 = pneg %p50
        %p217 = pneg %p47
        %p218 = pneg %p71
        %p219 = pneg %p68
        %s220 = sand.u32 %s86, 1
        %s221 = scalar_lea.sflag [#allocation3], %s220
        %s222 = sand.u32 %s86, 1
        %s223 = smul.addr %s222, 8
        %s224 = scalar_lea.vmem [#allocation8], %s223
        %p225 = pneg %p99
        %p226 = pneg %p96
        %p227 = pneg %p127
        %p228 = pneg %p124
        %s229 = sand.u32 %s114, 1
        %s230 = scalar_lea.sflag [#allocation4], %s229
        %s231 = sand.u32 %s114, 1
        %s232 = smul.addr %s231, 8
        %s233 = scalar_lea.vmem [#allocation9], %s232
        %s234 = smul.u32 2, %s27
        %s235 = smul.u32 2, %s27
        %v236 = vld [vmem:[%s209] sm:$0xff]
        %s237 = sld [smem:[#allocation2]]
        %v238 = vstv %s237
        %v239 = vmul.f32 %v236, %v238
        %s240 = sld [smem:[#allocation2 + $0x1]]
        %v241 = vstv %s240
        %v242 = vmul.f32 %v236, %v241
        %v244 = vrot.slane %v242, 5
        %v245 = vrot.slane %v244, 4
        %v247 = vadd.f32 %v239, %v245
        %s248 = sld [smem:[#allocation2 + $0x2]]
        %v249 = vstv %s248
        %v250 = vmul.f32 %v236, %v249
        %v252 = vrot.slane %v250, 6
        %v253 = vrot.slane %v252, 4
        %v255 = vadd.f32 %v247, %v253
        %s256 = sld [smem:[#allocation2 + $0x3]]
        %v257 = vstv %s256
        %v258 = vmul.f32 %v236, %v257
        %v260 = vrot.slane %v258, 7
        %v261 = vrot.slane %v260, 4
        %v263 = vadd.f32 %v255, %v261
        %s264 = sld [smem:[#allocation6]]
        %v265 = vstv %s264
        %v266 = vadd.f32 %v263, %v265
        %v267 = vxor.u32 %v266, 2147483648
        %v268 = vmul.f32 %v267, 1.442695
        %v269 = vpow.pop %v268
        %v270 = vadd.f32 %v269, 1.0
        %v271 = vrcp.pop %v270
        %v272 = vmul.f32 %v270, %v271
        %v273 = vsub.f32 1.0, %v272
        %v274 = vmul.f32 %v271, %v273
        %v275 = vadd.f32 %v271, %v274
        %vm276 = vweird.f32 %v270
        %vm277 = vweird.f32 %v271
        %vm278 = vmor %vm276, %vm277
        %v279 = vsel %vm278, %v271, %v275
        %v280 = vand.u32 2147483647, %v270
        %vm281 = vcmp.eq.f32.partialorder %v280, 8.507059e+37
        %v282 = vand.u32 %v270, 2147483648
        %v283 = vor.u32 1.1754944e-38, %v282
        %v284 = vsel %vm281, %v283, %v279
        %v285 = vmul.f32 1.0, %v284
        %v286 = vmul.f32 %v236, %v285
        %s287 = sld [smem:[#allocation2 + $0x80]]
        %v288 = vstv %s287
        %v289 = vmul.f32 %v236, %v288
        %s290 = sld [smem:[#allocation2 + $0x81]]
        %v291 = vstv %s290
        %v292 = vmul.f32 %v236, %v291
        %v294 = vrot.slane %v292, 5
        %v295 = vrot.slane %v294, 4
        %v297 = vadd.f32 %v289, %v295
        %s298 = sld [smem:[#allocation2 + $0x82]]
        %v299 = vstv %s298
        %v300 = vmul.f32 %v236, %v299
        %v302 = vrot.slane %v300, 6
        %v303 = vrot.slane %v302, 4
        %v305 = vadd.f32 %v297, %v303
        %s306 = sld [smem:[#allocation2 + $0x83]]
        %v307 = vstv %s306
        %v308 = vmul.f32 %v236, %v307
        %v310 = vrot.slane %v308, 7
        %v311 = vrot.slane %v310, 4
        %v313 = vadd.f32 %v305, %v311
        %s314 = sld [smem:[#allocation6 + $0x1]]
        %v315 = vstv %s314
        %v316 = vadd.f32 %v313, %v315
        %v317 = vxor.u32 %v316, 2147483648
        %v318 = vmul.f32 %v317, 1.442695
        %v319 = vpow.pop %v318
        %v320 = vadd.f32 %v319, 1.0
        %v321 = vrcp.pop %v320
        %v322 = vmul.f32 %v320, %v321
        %v323 = vsub.f32 1.0, %v322
        %v324 = vmul.f32 %v321, %v323
        %v325 = vadd.f32 %v321, %v324
        %vm326 = vweird.f32 %v320
        %vm327 = vweird.f32 %v321
        %vm328 = vmor %vm326, %vm327
        %v329 = vsel %vm328, %v321, %v325
        %v330 = vand.u32 2147483647, %v320
        %vm331 = vcmp.eq.f32.partialorder %v330, 8.507059e+37
        %v332 = vand.u32 %v320, 2147483648
        %v333 = vor.u32 1.1754944e-38, %v332
        %v334 = vsel %vm331, %v333, %v329
        %v335 = vmul.f32 1.0, %v334
        %v337 = vrot.slane %v335, 7
        %v339 = vmul.f32 %v236, %v337
        %s340 = sld [smem:[#allocation2 + $0x100]]
        %v341 = vstv %s340
        %v342 = vmul.f32 %v236, %v341
        %s343 = sld [smem:[#allocation2 + $0x101]]
        %v344 = vstv %s343
        %v345 = vmul.f32 %v236, %v344
        %v347 = vrot.slane %v345, 5
        %v348 = vrot.slane %v347, 4
        %v350 = vadd.f32 %v342, %v348
        %s351 = sld [smem:[#allocation2 + $0x102]]
        %v352 = vstv %s351
        %v353 = vmul.f32 %v236, %v352
        %v355 = vrot.slane %v353, 6
        %v356 = vrot.slane %v355, 4
        %v358 = vadd.f32 %v350, %v356
        %s359 = sld [smem:[#allocation2 + $0x103]]
        %v360 = vstv %s359
        %v361 = vmul.f32 %v236, %v360
        %v363 = vrot.slane %v361, 7
        %v364 = vrot.slane %v363, 4
        %v366 = vadd.f32 %v358, %v364
        %s367 = sld [smem:[#allocation6 + $0x2]]
        %v368 = vstv %s367
        %v369 = vadd.f32 %v366, %v368
        %v370 = vxor.u32 %v369, 2147483648
        %v371 = vmul.f32 %v370, 1.442695
        %v372 = vpow.pop %v371
        %v373 = vadd.f32 %v372, 1.0
        %v374 = vrcp.pop %v373
        %v375 = vmul.f32 %v373, %v374
        %v376 = vsub.f32 1.0, %v375
        %v377 = vmul.f32 %v374, %v376
        %v378 = vadd.f32 %v374, %v377
        %vm379 = vweird.f32 %v373
        %vm380 = vweird.f32 %v374
        %vm381 = vmor %vm379, %vm380
        %v382 = vsel %vm381, %v374, %v378
        %v383 = vand.u32 2147483647, %v373
        %vm384 = vcmp.eq.f32.partialorder %v383, 8.507059e+37
        %v385 = vand.u32 %v373, 2147483648
        %v386 = vor.u32 1.1754944e-38, %v385
        %v387 = vsel %vm384, %v386, %v382
        %v388 = vmul.f32 1.0, %v387
        %v390 = vrot.slane %v388, 6
        %v392 = vmul.f32 %v236, %v390
        %s393 = sld [smem:[#allocation2 + $0x180]]
        %v394 = vstv %s393
        %v395 = vmul.f32 %v236, %v394
        %s396 = sld [smem:[#allocation2 + $0x181]]
        %v397 = vstv %s396
        %v398 = vmul.f32 %v236, %v397
        %v400 = vrot.slane %v398, 5
        %v401 = vrot.slane %v400, 4
        %v403 = vadd.f32 %v395, %v401
        %s404 = sld [smem:[#allocation2 + $0x182]]
        %v405 = vstv %s404
        %v406 = vmul.f32 %v236, %v405
        %v408 = vrot.slane %v406, 6
        %v409 = vrot.slane %v408, 4
        %v411 = vadd.f32 %v403, %v409
        %s412 = sld [smem:[#allocation2 + $0x183]]
        %v413 = vstv %s412
        %v414 = vmul.f32 %v236, %v413
        %v416 = vrot.slane %v414, 7
        %v417 = vrot.slane %v416, 4
        %v419 = vadd.f32 %v411, %v417
        %s420 = sld [smem:[#allocation6 + $0x3]]
        %v421 = vstv %s420
        %v422 = vadd.f32 %v419, %v421
        %v423 = vxor.u32 %v422, 2147483648
        %v424 = vmul.f32 %v423, 1.442695
        %v425 = vpow.pop %v424
        %v426 = vadd.f32 %v425, 1.0
        %v427 = vrcp.pop %v426
        %v428 = vmul.f32 %v426, %v427
        %v429 = vsub.f32 1.0, %v428
        %v430 = vmul.f32 %v427, %v429
        %v431 = vadd.f32 %v427, %v430
        %vm432 = vweird.f32 %v426
        %vm433 = vweird.f32 %v427
        %vm434 = vmor %vm432, %vm433
        %v435 = vsel %vm434, %v427, %v431
        %v436 = vand.u32 2147483647, %v426
        %vm437 = vcmp.eq.f32.partialorder %v436, 8.507059e+37
        %v438 = vand.u32 %v426, 2147483648
        %v439 = vor.u32 1.1754944e-38, %v438
        %v440 = vsel %vm437, %v439, %v435
        %v441 = vmul.f32 1.0, %v440
        %v443 = vrot.slane %v441, 5
        %v445 = vmul.f32 %v236, %v443
        %v447 = vperm.slane %v286, 0
        %v448 = vperm.slane %v286, 4
        %v452 = vperm.slane %v339, 1
        %v453 = vperm.slane %v339, 5
        %v457 = vperm.slane %v392, 2
        %v458 = vperm.slane %v392, 6
        %v462 = vperm.slane %v445, 3
        %v463 = vperm.slane %v445, 7
        %vm466 = vcmask 1040384
        %v467 = vsel %vm466, %v447, %v452
        %v468 = vsel %vm466, %v448, %v453
        %vm469 = vcmask 1041408
        %v470 = vsel %vm469, %v467, %v457
        %v471 = vsel %vm469, %v468, %v458
        %vm472 = vcmask 1042432
        %v473 = vsel %vm472, %v470, %v462
        %v474 = vsel %vm472, %v471, %v463
        %v477 = vrot.slane %v474, 4
        %vm478 = vcmask 1043456
        %v479 = vsel %vm478, %v473, %v477
        %481 = vst [vmem:[%s233] sm:$0xff] %v479
        %s482 = sand.u32 %s114, 1
        %s483 = scalar_lea.sflag [#allocation4], %s482
        %s484 = sand.u32 %s114, 1
        %s485 = smul.addr %s484, 8
        %s486 = scalar_lea.vmem [#allocation9], %s485
        // Predicated region
        $region45: #{tpu_custom_call.1} parent=31 // pred_check
          %p487 = pneg %p124
        $region46: #{tpu_custom_call.1} parent=31 // pred_check_branch
          %489 = sbr.rel (%p487) target = $region48
        $region47: #{tpu_custom_call.1} parent=31 // pred_region
          %s490 = smul.u32 2, %s27
          %492 = vsyncadd %s483, 0
          %s493 = smul.addr %s26, 2
          %s494 = sadd.s32 %s490, %s493
          %s495 = smul.addr %s494, 4
          %s496 = scalar_lea.hbm %s3, %s495
          %s498 = sshll.u32 %s486, 4
          %s499 = int_to_ptr.vmem [resolvable:$true] %s498
          %s500 = sshll.u32 %s496, 4
          %s501 = int_to_ptr.hbm [resolvable:$true] %s500
          %503 = dma.vmem_to_hbm [thread:$0]  %s499, 128, %s501, %s483
        $region48: #{tpu_custom_call.1} parent=31 // pred_fallthru
          _
      $region32: #{tpu_custom_call.1} parent=5 // pred_fallthru
        _
      %p504 = scmp.le.s32.totalorder 2, %s17
      // Predicated region
      $region49: #{tpu_custom_call.1} parent=5 // pred_check
        %p505 = pneg %p504
      $region50: #{tpu_custom_call.1} parent=5 // pred_check_branch
        %507 = sbr.rel (%p505) target = $region52
      $region51: #{tpu_custom_call.1} parent=5 // pred_region
        %s508 = ssub.s32 %s17, 2
        // Predicated region
        $region53: #{tpu_custom_call.1} parent=51 // pred_check
          %p509 = pneg %p130
        $region54: #{tpu_custom_call.1} parent=51 // pred_check_branch
          %511 = sbr.rel (%p509) target = $region56
        $region55: #{tpu_custom_call.1} parent=51 // pred_region
          %s512 = sand.u32 %s115, 1
          %s513 = scalar_lea.sflag [#allocation4], %s512
          %s514 = sand.u32 %s115, 1
          %s515 = smul.addr %s514, 8
          %s516 = scalar_lea.vmem [#allocation9], %s515
          %518 = dma.done %s513, 128
        $region56: #{tpu_custom_call.1} parent=51 // pred_fallthru
          _
      $region52: #{tpu_custom_call.1} parent=5 // pred_fallthru
        _
    $region6: #{tpu_custom_call.1} parent=1 // loop_footer
      %s21 = sadd.s32 1, %s17
    $region7: #{tpu_custom_call.1} parent=1 // loop_footer_branch
      %16 = sbr.rel target = $region3
    $region8: #{tpu_custom_call.1} parent=1 // loop_exit
      _
    %519 = vsyncpa [#allocation3], 1
    %s520 = scalar_lea.sflag [#allocation3], 1
    %521 = vsyncpa %s520, 1
    %522 = vsyncpa [#allocation4], 1
    %s523 = scalar_lea.sflag [#allocation4], 1
    %524 = vsyncpa %s523, 1
    %525 = vsyncpa [#allocation5], 1
    %s526 = scalar_lea.sflag [#allocation5], 1
    %527 = vsyncpa %s526, 1
    %528 = vsyncpa [#allocation7], 1

</llo_original>
